<compile_context>
chip_gen: v6e
topology: v6e:2x2x1
jax: 0.10.0
libtpu: 0.0.40
codegen_flags: <defaults>
</compile_context>

<pallas_src>
import jax
import jax.numpy as jnp
from jax.experimental import pallas as pl
from jax.experimental.pallas import tpu as pltpu

EPS = 1e-5
VMEM_LIMIT = 32 * 1024 * 1024   # explicit; per-step working set here is tiny.
                                # v7x has 64 MiB physical / 32 MiB scoped VMEM.


# --------------------------------------------------------------------------
# banded conv weight:  wb[dh, wp*Ci+ci, w*Co+co] = k[dh, wp-w, ci, co]  (0 off-band)
# --------------------------------------------------------------------------
def _banded_weight(k, W):
    """k: (KH, KW, Ci, Co) f32 -> (KH, (W+KW-1)*Ci, W*Co) f32, banded."""
    KH, KW, Ci, Co = k.shape
    Wp = W + KW - 1
    # P[wp, w, dw] = 1 iff wp == w + dw
    P = (jnp.arange(Wp)[:, None, None]
         == (jnp.arange(W)[None, :, None] + jnp.arange(KW)[None, None, :])
         ).astype(jnp.float32)
    wb = jnp.einsum('pwd,hdio->hpiwo', P, k)              # (KH, Wp, Ci, W, Co)
    return wb.reshape(KH, Wp * Ci, W * Co)


def _pick_batch_block(N, H, W, Cin, Cout, budget_bytes=8 << 20):
    """Largest divisor of N whose double-buffered per-step activation slab fits
    a v7x-safe budget (well under 32 MiB scoped VMEM).  For large batches the
    grid stays >= 2 so ("parallel",) feeds both v7x TensorCores; on v5e/v6e
    (1 TC) fewer/fatter steps are strictly better."""
    per_img = 4 * ((H + 2) * (W + 2) * (Cin + Cout) + 3 * H * W * Cout)
    nb = 1
    for d in range(1, N + 1):
        if N % d == 0 and 2 * d * per_img <= budget_bytes:
            nb = d
    return nb


# --------------------------------------------------------------------------
# pass A: norm_in + fused conv_in/conv_skip (+ReLU on conv_in) + lane-dense h stats
# --------------------------------------------------------------------------
def _conv_in_skip_kernel(xpad_ref, scale_ref, shift_ref, w_ref, b_ref,
                         h_ref, skip_ref, hstat_ref):
    # xpad_ref : (Nb, H+2, (W+2)*Cin) f32, halo pre-filled with -shift/scale
    # scale/shift: (1, (W+2)*Cin) f32        w_ref: (3, (W+2)*Cin, 2*W*Cout)
    # b_ref: (1, 2*W*Cout) f32
    # h_ref, skip_ref: (Nb, H, W*Cout) f32   hstat_ref: (1, 2, W*Cout) f32
    Nb, Hp, K = xpad_ref.shape
    H = Hp - 2
    M = Nb * H
    WCo2 = w_ref.shape[2]
    WCo = WCo2 // 2

    acc = jnp.zeros((M, WCo2), jnp.float32)
    for dh in range(3):
        rows = xpad_ref[:, dh:dh + H, :].reshape(M, K)          # offset load, no relayout
        lhs = (rows * scale_ref[...] + shift_ref[...]).astype(w_ref.dtype)
        acc = acc + jnp.dot(lhs, w_ref[dh], preferred_element_type=jnp.float32)
    acc = acc + b_ref[...]

    h = jnp.maximum(acc[:, :WCo], 0.0)       # relu(conv_in(xn)); 128-lane slice
    skip = acc[:, WCo:]                      # conv_skip(xn)

    # Lane-dense stores (leading-dim reshape only).
    h_ref[...] = h.reshape(Nb, H, WCo)
    skip_ref[...] = skip.reshape(Nb, H, WCo)

    # Lane-dense single-pass norm_out partial stats: reduce over rows only,
    # keep (w, co) in the 128-lane axis; the W-reduction finishes in the wrapper.
    hstat_ref[0:1, 0:1, :] = jnp.sum(h, axis=0, keepdims=True).reshape(1, 1, WCo)
    hstat_ref[0:1, 1:2, :] = jnp.sum(h * h, axis=0, keepdims=True).reshape(1, 1, WCo)


# --------------------------------------------------------------------------
# pass B: norm_out + conv_out + residual add + ReLU
# --------------------------------------------------------------------------
def _conv_out_kernel(hpad_ref, skip_ref, scale_ref, shift_ref, w_ref, b_ref, o_ref):
    # hpad_ref: (Nb, H+2, (W+2)*Cout) f32, halo pre-filled with -shift/scale
    Nb, Hp, K = hpad_ref.shape
    H = Hp - 2
    M = Nb * H
    WCo = w_ref.shape[2]

    acc = jnp.zeros((M, WCo), jnp.float32)
    for dh in range(3):
        rows = hpad_ref[:, dh:dh + H, :].reshape(M, K)
        lhs = (rows * scale_ref[...] + shift_ref[...]).astype(w_ref.dtype)
        acc = acc + jnp.dot(lhs, w_ref[dh], preferred_element_type=jnp.float32)

    out = jnp.maximum(acc + b_ref[...] + skip_ref[...].reshape(M, WCo), 0.0)
    o_ref[...] = out.reshape(Nb, H, WCo)


# --------------------------------------------------------------------------
# wrapper
# --------------------------------------------------------------------------
def conv_res_block(x_nchw, params, mxu_dtype=jnp.bfloat16):
    """x_nchw: (N, Cin, H, W) f32 -> (N, Cout, H, W) f32 (training-mode BN)."""
    x = jnp.transpose(x_nchw, (0, 2, 3, 1)).astype(jnp.float32)    # NCHW -> NHWC
    N, H, W, Cin = x.shape
    Cout = params["w_in"].shape[-1]
    NHW = N * H * W
    itemsize = jnp.dtype(mxu_dtype).itemsize

    # ---- norm_in statistics in the wrapper (x read once either way), two-pass ----
    mean_x = jnp.mean(x, axis=(0, 1, 2))
    var_x = jnp.mean(jnp.square(x - mean_x), axis=(0, 1, 2))
    scale_in = params["g_in"].reshape(-1) * jax.lax.rsqrt(var_x + EPS)
    shift_in = params["be_in"].reshape(-1) - mean_x * scale_in

    # Sentinel pre-pad: halo value v with v*scale+shift == 0, so the in-kernel
    # normalization reproduces the conv's zero padding exactly.
    # TODO(synk): gamma==0 channels would break the sentinel (default init is 1).
    halo_in = -shift_in / jnp.where(scale_in == 0, 1.0, scale_in)
    x_pad = (jnp.broadcast_to(halo_in.reshape(1, 1, 1, Cin), (N, H + 2, W + 2, Cin))
             .at[:, 1:H + 1, 1:W + 1, :].set(x)
             .reshape(N, H + 2, (W + 2) * Cin))
    scale_in_f = jnp.tile(scale_in, W + 2).reshape(1, (W + 2) * Cin)
    shift_in_f = jnp.tile(shift_in, W + 2).reshape(1, (W + 2) * Cin)

    # Banded weights; conv_in and conv_skip fused along the output-lane axis
    # (h in lanes [0, W*Cout), skip in lanes [W*Cout, 2*W*Cout)).
    w2 = jnp.concatenate(
        [_banded_weight(params["w_in"].reshape(3, 3, Cin, Cout), W),
         _banded_weight(params["w_skip"].reshape(3, 3, Cin, Cout), W)],
        axis=-1).astype(mxu_dtype)                           # (3, (W+2)Cin, 2*W*Cout)
    b2 = jnp.concatenate([jnp.tile(params["b_in"].reshape(-1), W),
                          jnp.tile(params["b_skip"].reshape(-1), W)]
                         ).reshape(1, 2 * W * Cout)

    Nb = _pick_batch_block(N, H, W, Cin, Cout)
    grid_n = N // Nb
    parallel = pltpu.CompilerParams(dimension_semantics=("parallel",),
                                    vmem_limit_bytes=VMEM_LIMIT)

    K2, N2 = (W + 2) * Cin, 2 * W * Cout
    flops2 = 2 * N * H * 3 * K2 * N2
    bytes2 = (4 * (N * (H + 2) * K2 + 2 * N * H * W * Cout + grid_n * 2 * W * Cout
                   + 2 * K2 + N2) + itemsize * 3 * K2 * N2)

    h_flat, skip_flat, hstats = pl.pallas_call(
        _conv_in_skip_kernel,
        out_shape=(jax.ShapeDtypeStruct((N, H, W * Cout), jnp.float32),
                   jax.ShapeDtypeStruct((N, H, W * Cout), jnp.float32),
                   jax.ShapeDtypeStruct((grid_n, 2, W * Cout), jnp.float32)),
        grid=(grid_n,),
        in_specs=[
            pl.BlockSpec((Nb, H + 2, (W + 2) * Cin), lambda n: (n, 0, 0)),
            pl.BlockSpec((1, (W + 2) * Cin), lambda n: (0, 0)),
            pl.BlockSpec((1, (W + 2) * Cin), lambda n: (0, 0)),
            pl.BlockSpec((3, (W + 2) * Cin, 2 * W * Cout), lambda n: (0, 0, 0)),
            pl.BlockSpec((1, 2 * W * Cout), lambda n: (0, 0)),
        ],
        out_specs=(
            pl.BlockSpec((Nb, H, W * Cout), lambda n: (n, 0, 0)),
            pl.BlockSpec((Nb, H, W * Cout), lambda n: (n, 0, 0)),
            pl.BlockSpec((1, 2, W * Cout), lambda n: (n, 0, 0)),
        ),
        compiler_params=parallel,
        cost_estimate=pl.CostEstimate(flops=flops2, transcendentals=0,
                                      bytes_accessed=bytes2),
    )(x_pad, scale_in_f, shift_in_f, w2, b2)

    # ---- finish the lane-dense h statistics (sum over blocks, then over W) ----
    sh = jnp.sum(hstats, axis=0).reshape(2, W, Cout).sum(axis=1)     # (2, Cout)
    mean_h = sh[0] / NHW
    var_h = jnp.maximum(sh[1] / NHW - mean_h * mean_h, 0.0)   # single-pass; clamp
    scale_out = params["g_out"].reshape(-1) * jax.lax.rsqrt(var_h + EPS)
    shift_out = params["be_out"].reshape(-1) - mean_h * scale_out
    halo_out = -shift_out / jnp.where(scale_out == 0, 1.0, scale_out)

    h_pad = (jnp.broadcast_to(halo_out.reshape(1, 1, 1, Cout), (N, H + 2, W + 2, Cout))
             .at[:, 1:H + 1, 1:W + 1, :].set(h_flat.reshape(N, H, W, Cout))
             .reshape(N, H + 2, (W + 2) * Cout))
    scale_out_f = jnp.tile(scale_out, W + 2).reshape(1, (W + 2) * Cout)
    shift_out_f = jnp.tile(shift_out, W + 2).reshape(1, (W + 2) * Cout)
    w3 = _banded_weight(params["w_out"].reshape(3, 3, Cout, Cout), W).astype(mxu_dtype)
    b3 = jnp.tile(params["b_out"].reshape(-1), W).reshape(1, W * Cout)

    K3, N3 = (W + 2) * Cout, W * Cout
    flops3 = 2 * N * H * 3 * K3 * N3
    bytes3 = (4 * (N * (H + 2) * K3 + 2 * N * H * W * Cout + 2 * K3 + N3)
              + itemsize * 3 * K3 * N3)

    out_flat = pl.pallas_call(
        _conv_out_kernel,
        out_shape=jax.ShapeDtypeStruct((N, H, W * Cout), jnp.float32),
        grid=(grid_n,),
        in_specs=[
            pl.BlockSpec((Nb, H + 2, (W + 2) * Cout), lambda n: (n, 0, 0)),
            pl.BlockSpec((Nb, H, W * Cout), lambda n: (n, 0, 0)),
            pl.BlockSpec((1, (W + 2) * Cout), lambda n: (0, 0)),
            pl.BlockSpec((1, (W + 2) * Cout), lambda n: (0, 0)),
            pl.BlockSpec((3, (W + 2) * Cout, W * Cout), lambda n: (0, 0, 0)),
            pl.BlockSpec((1, W * Cout), lambda n: (0, 0)),
        ],
        out_specs=pl.BlockSpec((Nb, H, W * Cout), lambda n: (n, 0, 0)),
        compiler_params=parallel,
        cost_estimate=pl.CostEstimate(flops=flops3, transcendentals=0,
                                      bytes_accessed=bytes3),
    )(h_pad, skip_flat, scale_out_f, shift_out_f, w3, b3)

    out = out_flat.reshape(N, H, W, Cout)
    return jnp.transpose(out, (0, 3, 1, 2))                          # NHWC -> NCHW


# --------------------------------------------------------------------------
# pure-JAX reference (matches the PyTorch forward, training-mode BN)
# --------------------------------------------------------------------------
def reference(x_nchw, params):
    x = jnp.transpose(x_nchw, (0, 2, 3, 1)).astype(jnp.float32)

    def bn(v, gamma, beta):
        mean = jnp.mean(v, axis=(0, 1, 2), keepdims=True)
        var = jnp.mean((v - mean) ** 2, axis=(0, 1, 2), keepdims=True)
        return ((v - mean) / jnp.sqrt(var + EPS)) * gamma.reshape(1, 1, 1, -1) \
               + beta.reshape(1, 1, 1, -1)

    def conv(v, w9, b):
        k = w9.reshape(3, 3, w9.shape[1], w9.shape[2])
        y = jax.lax.conv_general_dilated(
            v, k, (1, 1), "SAME",
            dimension_numbers=("NHWC", "HWIO", "NHWC"))
        return y + b.reshape(1, 1, 1, -1)

    xn = bn(x, params["g_in"], params["be_in"])
    h = jax.nn.relu(conv(xn, params["w_in"], params["b_in"]))
    hn = bn(h, params["g_out"], params["be_out"])
    h2 = conv(hn, params["w_out"], params["b_out"])
    skip = conv(xn, params["w_skip"], params["b_skip"])
    out = jax.nn.relu(h2 + skip)
    return jnp.transpose(out, (0, 3, 1, 2))


if __name__ == "__main__":
    # TODO(synk): only the default kernel1x1=False (3x3, padding=1) branch with
    # Cin != Cout (conv_skip) is implemented; the 1x1 / Identity-skip variants
    # would drop the banded structure to a plain (Cin, Cout) matmul.
    # TODO(synk): the banded-weight formulation targets small W*Cout (a few
    # vreg columns); very large W would need W-tiling or an im2col fallback,
    # and very large H*W needs H-row-band blocking.
    key = jax.random.PRNGKey(0)
    ks = jax.random.split(key, 8)

    N, Cin, Cout, H, W = 2, 4, 8, 16, 16
    x = jax.random.normal(ks[0], (N, Cin, H, W), jnp.float32)

    params = dict(
        # conv weights stored as (K*K, Cin, Cout); biases as (1, Cout)
        w_in=0.1 * jax.random.normal(ks[1], (9, Cin, Cout), jnp.float32),
        b_in=0.1 * jax.random.normal(ks[2], (1, Cout), jnp.float32),
        w_out=0.1 * jax.random.normal(ks[3], (9, Cout, Cout), jnp.float32),
        b_out=0.1 * jax.random.normal(ks[4], (1, Cout), jnp.float32),
        w_skip=0.1 * jax.random.normal(ks[5], (9, Cin, Cout), jnp.float32),
        b_skip=0.1 * jax.random.normal(ks[6], (1, Cout), jnp.float32),
        # BatchNorm affine params: PyTorch default init (weight=1, bias=0)
        g_in=jnp.ones((1, Cin), jnp.float32),
        be_in=jnp.zeros((1, Cin), jnp.float32),
        g_out=jnp.ones((1, Cout), jnp.float32),
        be_out=jnp.zeros((1, Cout), jnp.float32),
    )

    ref = jax.block_until_ready(reference(x, params))

    # f32-MXU path: tight structural/semantic check against the reference.
    out_f32 = jax.block_until_ready(conv_res_block(x, params, mxu_dtype=jnp.float32))
    assert out_f32.shape == (N, Cout, H, W), out_f32.shape
    assert jnp.allclose(out_f32, ref, atol=2e-4, rtol=2e-4), \
        float(jnp.max(jnp.abs(out_f32 - ref)))

    # bf16-MXU-operand path (the performance configuration): looser tolerance for
    # bf16 operand rounding; accumulation and all BN/ReLU/residual math stay f32.
    out_bf16 = jax.block_until_ready(conv_res_block(x, params, mxu_dtype=jnp.bfloat16))
    assert out_bf16.shape == (N, Cout, H, W), out_bf16.shape
    assert jnp.allclose(out_bf16, ref, atol=2e-2, rtol=2e-2), \
        float(jnp.max(jnp.abs(out_bf16 - ref)))

    print("KERNEL_OK")
</pallas_src>

<mosaic_0001>
module attributes {stable_mosaic.version = 11 : i64} {
  func.func @_conv_in_skip_kernel(%arg0: i32, %arg1: memref<2x18x72xf32, #tpu.memory_space<vmem>>, %arg2: memref<1x72xf32, #tpu.memory_space<vmem>>, %arg3: memref<1x72xf32, #tpu.memory_space<vmem>>, %arg4: memref<3x72x256xf32, #tpu.memory_space<vmem>>, %arg5: memref<1x256xf32, #tpu.memory_space<vmem>>, %arg6: memref<2x16x128xf32, #tpu.memory_space<vmem>>, %arg7: memref<2x16x128xf32, #tpu.memory_space<vmem>>, %arg8: memref<1x2x128xf32, #tpu.memory_space<vmem>>) attributes {dimension_semantics = [#tpu.dimension_semantics<parallel>], iteration_bounds = array<i64: 1>, scalar_prefetch = 0 : i64, scratch_operands = 0 : i64, tpu.core_type = #tpu.core_type<tc>, window_params = [{transform_indices = @transform_0, window_bounds = array<i64: 2, 18, 72>}, {pipeline_mode = #tpu.pipeline_mode<synchronous>, transform_indices = @transform_1, window_bounds = array<i64: 1, 72>}, {pipeline_mode = #tpu.pipeline_mode<synchronous>, transform_indices = @transform_2, window_bounds = array<i64: 1, 72>}, {pipeline_mode = #tpu.pipeline_mode<synchronous>, transform_indices = @transform_3, window_bounds = array<i64: 3, 72, 256>}, {pipeline_mode = #tpu.pipeline_mode<synchronous>, transform_indices = @transform_4, window_bounds = array<i64: 1, 256>}, {transform_indices = @transform_5, window_bounds = array<i64: 2, 16, 128>}, {transform_indices = @transform_6, window_bounds = array<i64: 2, 16, 128>}, {transform_indices = @transform_7, window_bounds = array<i64: 1, 2, 128>}]} {
    %cst = arith.constant 0.000000e+00 : f32
    %0 = vector.broadcast %cst : f32 to vector<32x256xf32>
    %c0 = arith.constant 0 : index
    %c0_0 = arith.constant 0 : index
    %c0_1 = arith.constant 0 : index
    %1 = vector.load %arg1[%c0, %c0_0, %c0_1] : memref<2x18x72xf32, #tpu.memory_space<vmem>>, vector<2x16x72xf32>
    %2 = vector.shape_cast %1 : vector<2x16x72xf32> to vector<32x72xf32>
    %c0_2 = arith.constant 0 : index
    %c0_3 = arith.constant 0 : index
    %3 = vector.load %arg2[%c0_2, %c0_3] : memref<1x72xf32, #tpu.memory_space<vmem>>, vector<1x72xf32>
    %4 = vector.broadcast %3 : vector<1x72xf32> to vector<32x72xf32>
    %5 = arith.mulf %2, %4 : vector<32x72xf32>
    %c0_4 = arith.constant 0 : index
    %c0_5 = arith.constant 0 : index
    %6 = vector.load %arg3[%c0_4, %c0_5] : memref<1x72xf32, #tpu.memory_space<vmem>>, vector<1x72xf32>
    %7 = vector.broadcast %6 : vector<1x72xf32> to vector<32x72xf32>
    %8 = arith.addf %5, %7 : vector<32x72xf32>
    %c0_6 = arith.constant 0 : index
    %c0_7 = arith.constant 0 : index
    %c0_8 = arith.constant 0 : index
    %9 = vector.load %arg4[%c0_6, %c0_7, %c0_8] : memref<3x72x256xf32, #tpu.memory_space<vmem>>, vector<1x72x256xf32>
    %10 = vector.shape_cast %9 : vector<1x72x256xf32> to vector<72x256xf32>
    %cst_9 = arith.constant dense<0.000000e+00> : vector<32x256xf32>
    %11 = tpu.matmul %8, %10, %cst_9 {dimension_numbers = #tpu.dot_dimension_numbers<[1], [0], [0], [1], [0, 0, 1, 1], [], []>} : vector<32x72xf32>, vector<72x256xf32>, vector<32x256xf32> -> vector<32x256xf32>
    %12 = arith.addf %0, %11 : vector<32x256xf32>
    %c0_10 = arith.constant 0 : index
    %c1 = arith.constant 1 : index
    %c0_11 = arith.constant 0 : index
    %13 = vector.load %arg1[%c0_10, %c1, %c0_11] : memref<2x18x72xf32, #tpu.memory_space<vmem>>, vector<2x16x72xf32>
    %14 = vector.shape_cast %13 : vector<2x16x72xf32> to vector<32x72xf32>
    %c0_12 = arith.constant 0 : index
    %c0_13 = arith.constant 0 : index
    %15 = vector.load %arg2[%c0_12, %c0_13] : memref<1x72xf32, #tpu.memory_space<vmem>>, vector<1x72xf32>
    %16 = vector.broadcast %15 : vector<1x72xf32> to vector<32x72xf32>
    %17 = arith.mulf %14, %16 : vector<32x72xf32>
    %c0_14 = arith.constant 0 : index
    %c0_15 = arith.constant 0 : index
    %18 = vector.load %arg3[%c0_14, %c0_15] : memref<1x72xf32, #tpu.memory_space<vmem>>, vector<1x72xf32>
    %19 = vector.broadcast %18 : vector<1x72xf32> to vector<32x72xf32>
    %20 = arith.addf %17, %19 : vector<32x72xf32>
    %c1_16 = arith.constant 1 : index
    %c0_17 = arith.constant 0 : index
    %c0_18 = arith.constant 0 : index
    %21 = vector.load %arg4[%c1_16, %c0_17, %c0_18] : memref<3x72x256xf32, #tpu.memory_space<vmem>>, vector<1x72x256xf32>
    %22 = vector.shape_cast %21 : vector<1x72x256xf32> to vector<72x256xf32>
    %cst_19 = arith.constant dense<0.000000e+00> : vector<32x256xf32>
    %23 = tpu.matmul %20, %22, %cst_19 {dimension_numbers = #tpu.dot_dimension_numbers<[1], [0], [0], [1], [0, 0, 1, 1], [], []>} : vector<32x72xf32>, vector<72x256xf32>, vector<32x256xf32> -> vector<32x256xf32>
    %24 = arith.addf %12, %23 : vector<32x256xf32>
    %c0_20 = arith.constant 0 : index
    %c2 = arith.constant 2 : index
    %c0_21 = arith.constant 0 : index
    %25 = vector.load %arg1[%c0_20, %c2, %c0_21] : memref<2x18x72xf32, #tpu.memory_space<vmem>>, vector<2x16x72xf32>
    %26 = vector.shape_cast %25 : vector<2x16x72xf32> to vector<32x72xf32>
    %c0_22 = arith.constant 0 : index
    %c0_23 = arith.constant 0 : index
    %27 = vector.load %arg2[%c0_22, %c0_23] : memref<1x72xf32, #tpu.memory_space<vmem>>, vector<1x72xf32>
    %28 = vector.broadcast %27 : vector<1x72xf32> to vector<32x72xf32>
    %29 = arith.mulf %26, %28 : vector<32x72xf32>
    %c0_24 = arith.constant 0 : index
    %c0_25 = arith.constant 0 : index
    %30 = vector.load %arg3[%c0_24, %c0_25] : memref<1x72xf32, #tpu.memory_space<vmem>>, vector<1x72xf32>
    %31 = vector.broadcast %30 : vector<1x72xf32> to vector<32x72xf32>
    %32 = arith.addf %29, %31 : vector<32x72xf32>
    %c2_26 = arith.constant 2 : index
    %c0_27 = arith.constant 0 : index
    %c0_28 = arith.constant 0 : index
    %33 = vector.load %arg4[%c2_26, %c0_27, %c0_28] : memref<3x72x256xf32, #tpu.memory_space<vmem>>, vector<1x72x256xf32>
    %34 = vector.shape_cast %33 : vector<1x72x256xf32> to vector<72x256xf32>
    %cst_29 = arith.constant dense<0.000000e+00> : vector<32x256xf32>
    %35 = tpu.matmul %32, %34, %cst_29 {dimension_numbers = #tpu.dot_dimension_numbers<[1], [0], [0], [1], [0, 0, 1, 1], [], []>} : vector<32x72xf32>, vector<72x256xf32>, vector<32x256xf32> -> vector<32x256xf32>
    %36 = arith.addf %24, %35 : vector<32x256xf32>
    %c0_30 = arith.constant 0 : index
    %c0_31 = arith.constant 0 : index
    %37 = vector.load %arg5[%c0_30, %c0_31] : memref<1x256xf32, #tpu.memory_space<vmem>>, vector<1x256xf32>
    %38 = vector.broadcast %37 : vector<1x256xf32> to vector<32x256xf32>
    %39 = arith.addf %36, %38 : vector<32x256xf32>
    %40 = vector.extract_strided_slice %39 {offsets = [0, 0], sizes = [32, 128], strides = [1, 1]} : vector<32x256xf32> to vector<32x128xf32>
    %cst_32 = arith.constant 0.000000e+00 : f32
    %41 = vector.broadcast %cst_32 : f32 to vector<32x128xf32>
    %42 = arith.maximumf %40, %41 : vector<32x128xf32>
    %43 = vector.extract_strided_slice %39 {offsets = [0, 128], sizes = [32, 128], strides = [1, 1]} : vector<32x256xf32> to vector<32x128xf32>
    %44 = vector.shape_cast %42 : vector<32x128xf32> to vector<2x16x128xf32>
    %c0_33 = arith.constant 0 : index
    %c0_34 = arith.constant 0 : index
    %c0_35 = arith.constant 0 : index
    %45 = vector.load %arg6[%c0_33, %c0_34, %c0_35] : memref<2x16x128xf32, #tpu.memory_space<vmem>>, vector<2x16x128xf32>
    tpu.vector_store %arg6[%c0_33, %c0_34, %c0_35], %44 {strides = array<i32>} : memref<2x16x128xf32, #tpu.memory_space<vmem>>, vector<2x16x128xf32>,
    %46 = vector.shape_cast %43 : vector<32x128xf32> to vector<2x16x128xf32>
    %c0_36 = arith.constant 0 : index
    %c0_37 = arith.constant 0 : index
    %c0_38 = arith.constant 0 : index
    %47 = vector.load %arg7[%c0_36, %c0_37, %c0_38] : memref<2x16x128xf32, #tpu.memory_space<vmem>>, vector<2x16x128xf32>
    tpu.vector_store %arg7[%c0_36, %c0_37, %c0_38], %46 {strides = array<i32>} : memref<2x16x128xf32, #tpu.memory_space<vmem>>, vector<2x16x128xf32>,
    %cst_39 = arith.constant dense<0.000000e+00> : vector<128xf32>
    %48 = vector.multi_reduction <add>, %42, %cst_39 [0] : vector<32x128xf32> to vector<128xf32>
    %49 = vector.shape_cast %48 : vector<128xf32> to vector<1x128xf32>
    %50 = vector.shape_cast %49 : vector<1x128xf32> to vector<1x1x128xf32>
    %c0_40 = arith.constant 0 : index
    %c0_41 = arith.constant 0 : index
    %c0_42 = arith.constant 0 : index
    %51 = vector.load %arg8[%c0_40, %c0_41, %c0_42] : memref<1x2x128xf32, #tpu.memory_space<vmem>>, vector<1x1x128xf32>
    tpu.vector_store %arg8[%c0_40, %c0_41, %c0_42], %50 {strides = array<i32>} : memref<1x2x128xf32, #tpu.memory_space<vmem>>, vector<1x1x128xf32>,
    %52 = arith.mulf %42, %42 : vector<32x128xf32>
    %cst_43 = arith.constant dense<0.000000e+00> : vector<128xf32>
    %53 = vector.multi_reduction <add>, %52, %cst_43 [0] : vector<32x128xf32> to vector<128xf32>
    %54 = vector.shape_cast %53 : vector<128xf32> to vector<1x128xf32>
    %55 = vector.shape_cast %54 : vector<1x128xf32> to vector<1x1x128xf32>
    %c0_44 = arith.constant 0 : index
    %c1_45 = arith.constant 1 : index
    %c0_46 = arith.constant 0 : index
    %56 = vector.load %arg8[%c0_44, %c1_45, %c0_46] : memref<1x2x128xf32, #tpu.memory_space<vmem>>, vector<1x1x128xf32>
    tpu.vector_store %arg8[%c0_44, %c1_45, %c0_46], %55 {strides = array<i32>} : memref<1x2x128xf32, #tpu.memory_space<vmem>>, vector<1x1x128xf32>,
    return
  }
  func.func @transform_0(%arg0: i32) -> (i32, i32, i32) {
    %c0_i32 = arith.constant 0 : i32
    %c0_i32_0 = arith.constant 0 : i32
    %c0_i32_1 = arith.constant 0 : i32
    return %arg0, %c0_i32, %c0_i32_0 : i32, i32, i32
  }
  func.func @transform_1(%arg0: i32) -> (i32, i32) {
    %c0_i32 = arith.constant 0 : i32
    %c0_i32_0 = arith.constant 0 : i32
    %c0_i32_1 = arith.constant 0 : i32
    return %c0_i32, %c0_i32_0 : i32, i32
  }
  func.func @transform_2(%arg0: i32) -> (i32, i32) {
    %c0_i32 = arith.constant 0 : i32
    %c0_i32_0 = arith.constant 0 : i32
    %c0_i32_1 = arith.constant 0 : i32
    return %c0_i32, %c0_i32_0 : i32, i32
  }
  func.func @transform_3(%arg0: i32) -> (i32, i32, i32) {
    %c0_i32 = arith.constant 0 : i32
    %c0_i32_0 = arith.constant 0 : i32
    %c0_i32_1 = arith.constant 0 : i32
    %c0_i32_2 = arith.constant 0 : i32
    return %c0_i32, %c0_i32_0, %c0_i32_1 : i32, i32, i32
  }
  func.func @transform_4(%arg0: i32) -> (i32, i32) {
    %c0_i32 = arith.constant 0 : i32
    %c0_i32_0 = arith.constant 0 : i32
    %c0_i32_1 = arith.constant 0 : i32
    return %c0_i32, %c0_i32_0 : i32, i32
  }
  func.func @transform_5(%arg0: i32) -> (i32, i32, i32) {
    %c0_i32 = arith.constant 0 : i32
    %c0_i32_0 = arith.constant 0 : i32
    %c0_i32_1 = arith.constant 0 : i32
    return %arg0, %c0_i32, %c0_i32_0 : i32, i32, i32
  }
  func.func @transform_6(%arg0: i32) -> (i32, i32, i32) {
    %c0_i32 = arith.constant 0 : i32
    %c0_i32_0 = arith.constant 0 : i32
    %c0_i32_1 = arith.constant 0 : i32
    return %arg0, %c0_i32, %c0_i32_0 : i32, i32, i32
  }
  func.func @transform_7(%arg0: i32) -> (i32, i32, i32) {
    %c0_i32 = arith.constant 0 : i32
    %c0_i32_0 = arith.constant 0 : i32
    %c0_i32_1 = arith.constant 0 : i32
    return %arg0, %c0_i32, %c0_i32_0 : i32, i32, i32
  }
}

</mosaic_0001>

<llo_original>
// kernel: tpu_custom_call.1
$region0: #{tpu_custom_call.1}
  #allocation0 [shape = 'u32[]', space=smem, size = 0x4, offset = 0x4, fixed_abs, tag = 'smem constant byte address 0x4 - core index']
  #allocation1 [shape = 'u32[144,128]{1,0:T(1,128)}', space=vmem, size = 0x12000, scoped, tag = 'internal scratch']
  %s0 = inlined_call_operand.vmem [shape: f32[2,18,72], index: 0, kind: input, shape index: {}]
  %s1 = inlined_call_operand.vmem [shape: f32[1,72], index: 1, kind: input, shape index: {}]
  %s2 = inlined_call_operand.vmem [shape: f32[1,72], index: 2, kind: input, shape index: {}]
  %s3 = inlined_call_operand.hbm [shape: f32[3,72,256], index: 3, kind: input, shape index: {}]
  %s4 = inlined_call_operand.vmem [shape: f32[1,256], index: 4, kind: input, shape index: {}]
  %s5 = inlined_call_operand.hbm [shape: f32[2,16,128], index: 5, kind: output, shape index: {0}]
  %s6 = inlined_call_operand.hbm [shape: f32[2,16,128], index: 6, kind: output, shape index: {1}]
  %s7 = inlined_call_operand.hbm [shape: f32[1,2,128], index: 7, kind: output, shape index: {2}]
  %8 = xla_tuple %s5, %s6, %s7
  %s9 = sld [smem:[#allocation0]]
  $region50: #{tpu_custom_call.1} parent=0
    _
  %s11 = ssub.s32 1, %s9
  %s12 = scalar_select 0, %s11, %s9
  $region1: #{tpu_custom_call.1} parent=0
    #allocation2 [shape = 'u8[221184]{0}', space=vmem, size = 0x36000, scoped, tag = 'input window, operand 3, single buffered']
    #allocation3 [shape = 's32[1]{0}', space=sflag, size = 0x4, scoped, tag = 'scoped memory for tpu_custom_call.1']
    #allocation4 [shape = 's32[1]{0}', space=sflag, size = 0x4, scoped, tag = 'scoped memory for tpu_custom_call.1']
    #allocation5 [shape = 'u8[16384]{0}', space=vmem, size = 0x4000, scoped, tag = 'output window, operand 0, single buffered']
    #allocation6 [shape = 'u8[16384]{0}', space=vmem, size = 0x4000, scoped, tag = 'output window, operand 1, single buffered']
    #allocation7 [shape = 's32[1]{0}', space=sflag, size = 0x4, scoped, tag = 'scoped memory for tpu_custom_call.1']
    #allocation8 [shape = 'u8[1024]{0}', space=vmem, size = 0x400, scoped, tag = 'output window, operand 2, single buffered']
    %13 = vsyncpa [#allocation3], 0
    %14 = vsyncpa [#allocation4], 0
    %15 = vsyncpa [#allocation7], 0
    // Predicated region
    $region2: #{tpu_custom_call.1} parent=1 // pred_check
      _
    $region3: #{tpu_custom_call.1} parent=1 // pred_check_branch
      %17 = sbr.rel (0) target = $region5
    $region4: #{tpu_custom_call.1} parent=1 // pred_region
      _
    $region5: #{tpu_custom_call.1} parent=1 // pred_fallthru
      _
    // Predicated region
    $region6: #{tpu_custom_call.1} parent=1 // pred_check
      _
    $region7: #{tpu_custom_call.1} parent=1 // pred_check_branch
      %19 = sbr.rel (0) target = $region9
    $region8: #{tpu_custom_call.1} parent=1 // pred_region
      _
    $region9: #{tpu_custom_call.1} parent=1 // pred_fallthru
      _
    // Predicated region
    $region10: #{tpu_custom_call.1} parent=1 // pred_check
      _
    $region11: #{tpu_custom_call.1} parent=1 // pred_check_branch
      %21 = sbr.rel (0) target = $region13
    $region12: #{tpu_custom_call.1} parent=1 // pred_region
      _
    $region13: #{tpu_custom_call.1} parent=1 // pred_fallthru
      _
    // Predicated region
    $region14: #{tpu_custom_call.1} parent=1 // pred_check
      _
    $region15: #{tpu_custom_call.1} parent=1 // pred_check_branch
      %23 = sbr.rel (0) target = $region17
    $region16: #{tpu_custom_call.1} parent=1 // pred_region
      %s25 = ssub.s32 6912, 6912
      %26 = vsyncadd [#allocation3], %s25
      %s27 = sshll.u32 [#allocation2], 4
      %s28 = int_to_ptr.vmem [resolvable:$true] %s27
      %33 = dma.hbm_to_vmem [thread:$0]  %s3, 6912, %s28, [#allocation3], 256, 256, 16
    $region17: #{tpu_custom_call.1} parent=1 // pred_fallthru
      _
    // Predicated region
    $region18: #{tpu_custom_call.1} parent=1 // pred_check
      _
    $region19: #{tpu_custom_call.1} parent=1 // pred_check_branch
      %35 = sbr.rel (0) target = $region21
    $region20: #{tpu_custom_call.1} parent=1 // pred_region
      _
    $region21: #{tpu_custom_call.1} parent=1 // pred_fallthru
      _
    // Predicated region
    $region22: #{tpu_custom_call.1} parent=1 // pred_check
      _
    $region23: #{tpu_custom_call.1} parent=1 // pred_check_branch
      %37 = sbr.rel (0) target = $region25
    $region24: #{tpu_custom_call.1} parent=1 // pred_region
      %38 = dma.done [#allocation3], 6912
    $region25: #{tpu_custom_call.1} parent=1 // pred_fallthru
      _
    %v39 = vld [vmem:[%s0] sm:$0xff]
    %v40 = vld [vmem:[%s0 + $0x8] sm:$0xff]
    %v41 = vld [vmem:[%s0 + $0x18] sm:$0xff]
    %v42 = vld [vmem:[%s0 + $0x20] sm:$0xff]
    %v43 = vld [vmem:[%s1] sm:$0x1]
    %v45 = vlaneseq
    %v46 = vshrl.u32 %v45, 7
    %v47 = vsub.s32 0, %v46
    %v48 = vrot.slane %v43, %v47
    %v50 = vmul.f32 %v39, %v48
    %v51 = vmul.f32 %v40, %v48
    %v52 = vmul.f32 %v41, %v48
    %v53 = vmul.f32 %v42, %v48
    %v54 = vld [vmem:[%s2] sm:$0x1]
    %v56 = vlaneseq
    %v57 = vshrl.u32 %v56, 7
    %v58 = vsub.s32 0, %v57
    %v59 = vrot.slane %v54, %v58
    %v61 = vadd.f32 %v50, %v59
    %v62 = vadd.f32 %v51, %v59
    %v63 = vadd.f32 %v52, %v59
    %v64 = vadd.f32 %v53, %v59
    %v65 = vld [vmem:[#allocation2] sm:$0xff]
    %v66 = vld [vmem:[#allocation2 + $0x8] sm:$0xff]
    %v67 = vld [vmem:[#allocation2 + $0x10] sm:$0xff]
    %v68 = vld [vmem:[#allocation2 + $0x18] sm:$0xff]
    %v69 = vld [vmem:[#allocation2 + $0x20] sm:$0xff]
    %v70 = vld [vmem:[#allocation2 + $0x28] sm:$0xff]
    %v71 = vld [vmem:[#allocation2 + $0x30] sm:$0xff]
    %v72 = vld [vmem:[#allocation2 + $0x38] sm:$0xff]
    %v73 = vld [vmem:[#allocation2 + $0x40] sm:$0xff]
    %v74 = vld [vmem:[#allocation2 + $0x48] sm:$0xff]
    %v75 = vld [vmem:[#allocation2 + $0x50] sm:$0xff]
    %v76 = vld [vmem:[#allocation2 + $0x58] sm:$0xff]
    %v77 = vld [vmem:[#allocation2 + $0x60] sm:$0xff]
    %v78 = vld [vmem:[#allocation2 + $0x68] sm:$0xff]
    %v79 = vld [vmem:[#allocation2 + $0x70] sm:$0xff]
    %v80 = vld [vmem:[#allocation2 + $0x78] sm:$0xff]
    %v81 = vld [vmem:[#allocation2 + $0x80] sm:$0xff]
    %v82 = vld [vmem:[#allocation2 + $0x88] sm:$0xff]
    %v83 = vld [vmem:[%s0 + $0x1] sm:$0xff]
    %v84 = vld [vmem:[%s0 + $0x9] sm:$0xff]
    %v85 = vld [vmem:[%s0 + $0x19] sm:$0xff]
    %v86 = vld [vmem:[%s0 + $0x21] sm:$0xff]
    %v87 = vmul.f32 %v83, %v48
    %v88 = vmul.f32 %v84, %v48
    %v89 = vmul.f32 %v85, %v48
    %v90 = vmul.f32 %v86, %v48
    %v91 = vadd.f32 %v87, %v59
    %v92 = vadd.f32 %v88, %v59
    %v93 = vadd.f32 %v89, %v59
    %v94 = vadd.f32 %v90, %v59
    %s95 = scalar_lea.vmem [#allocation2], 144
    %v96 = vld [vmem:[%s95] sm:$0xff]
    %v97 = vld [vmem:[%s95 + $0x8] sm:$0xff]
    %v98 = vld [vmem:[%s95 + $0x10] sm:$0xff]
    %v99 = vld [vmem:[%s95 + $0x18] sm:$0xff]
    %v100 = vld [vmem:[%s95 + $0x20] sm:$0xff]
    %v101 = vld [vmem:[%s95 + $0x28] sm:$0xff]
    %v102 = vld [vmem:[%s95 + $0x30] sm:$0xff]
    %v103 = vld [vmem:[%s95 + $0x38] sm:$0xff]
    %v104 = vld [vmem:[%s95 + $0x40] sm:$0xff]
    %v105 = vld [vmem:[%s95 + $0x48] sm:$0xff]
    %v106 = vld [vmem:[%s95 + $0x50] sm:$0xff]
    %v107 = vld [vmem:[%s95 + $0x58] sm:$0xff]
    %v108 = vld [vmem:[%s95 + $0x60] sm:$0xff]
    %v109 = vld [vmem:[%s95 + $0x68] sm:$0xff]
    %v110 = vld [vmem:[%s95 + $0x70] sm:$0xff]
    %v111 = vld [vmem:[%s95 + $0x78] sm:$0xff]
    %v112 = vld [vmem:[%s95 + $0x80] sm:$0xff]
    %v113 = vld [vmem:[%s95 + $0x88] sm:$0xff]
    %vm114 = vcmask 588800
    %v116 = vsel %vm114, %v91, 0
    %v119 = vsel %vm114, %v92, 0
    %v122 = vsel %vm114, %v93, 0
    %v125 = vsel %vm114, %v94, 0
    %127 = vmatprep.subr.mxu0 0.0
    %128 = vmatpush1.msra.mxu0 0.0
    %129 = vmatprep.subr.mxu0 0.0
    %130 = vmatpush1.msra.mxu0 0.0
    %131 = vmatprep.subr.mxu0 0.0
    %132 = vmatpush1.msra.mxu0 0.0
    %133 = vmatprep.subr.mxu0 0.0
    %134 = vmatpush1.msra.mxu0 0.0
    %135 = vmatprep.subr.mxu0 0.0
    %136 = vmatpush1.msra.mxu0 0.0
    %137 = vmatprep.subr.mxu0 0.0
    %138 = vmatpush1.msra.mxu0 0.0
    %139 = vmatprep.subr.mxu0 0.0
    %140 = vmatpush1.msra.mxu0 0.0
    %141 = vmatprep.subr.mxu0 %v113
    %142 = vmatpush1.msra.mxu0 %v112
    %143 = vmatprep.subr.mxu0 %v111
    %144 = vmatpush1.msra.mxu0 %v110
    %145 = vmatprep.subr.mxu0 %v109
    %146 = vmatpush1.msra.mxu0 %v108
    %147 = vmatprep.subr.mxu0 %v107
    %148 = vmatpush1.msra.mxu0 %v106
    %149 = vmatprep.subr.mxu0 %v105
    %150 = vmatpush1.msra.mxu0 %v104
    %151 = vmatprep.subr.mxu0 %v103
    %152 = vmatpush1.msra.mxu0 %v102
    %153 = vmatprep.subr.mxu0 %v101
    %154 = vmatpush1.msra.mxu0 %v100
    %155 = vmatprep.subr.mxu0 %v99
    %156 = vmatpush1.msra.mxu0 %v98
    %157 = vmatprep.subr.mxu0 %v97
    %158 = vmatpush1.msra.mxu0 %v96
    %159 = vmatprep.subr.mxu0 0.0
    %160 = vmatpush2.msra.mxu0 0.0
    %161 = vmatprep.subr.mxu0 0.0
    %162 = vmatpush2.msra.mxu0 0.0
    %163 = vmatprep.subr.mxu0 0.0
    %164 = vmatpush2.msra.mxu0 0.0
    %165 = vmatprep.subr.mxu0 0.0
    %166 = vmatpush2.msra.mxu0 0.0
    %167 = vmatprep.subr.mxu0 0.0
    %168 = vmatpush2.msra.mxu0 0.0
    %169 = vmatprep.subr.mxu0 0.0
    %170 = vmatpush2.msra.mxu0 0.0
    %171 = vmatprep.subr.mxu0 0.0
    %172 = vmatpush2.msra.mxu0 0.0
    %173 = vmatprep.subr.mxu0 0.0
    %174 = vmatpush2.msra.mxu0 0.0
    %175 = vmatprep.subr.mxu0 0.0
    %176 = vmatpush2.msra.mxu0 0.0
    %177 = vmatprep.subr.mxu0 0.0
    %178 = vmatpush2.msra.mxu0 0.0
    %179 = vmatprep.subr.mxu0 0.0
    %180 = vmatpush2.msra.mxu0 0.0
    %181 = vmatprep.subr.mxu0 0.0
    %182 = vmatpush2.msra.mxu0 0.0
    %183 = vmatprep.subr.mxu0 0.0
    %184 = vmatpush2.msra.mxu0 0.0
    %185 = vmatprep.subr.mxu0 0.0
    %186 = vmatpush2.msra.mxu0 0.0
    %187 = vmatprep.subr.mxu0 0.0
    %188 = vmatpush2.msra.mxu0 0.0
    %189 = vmatprep.subr.mxu0 0.0
    %190 = vmatpush2.msra.mxu0 0.0
    %191 = vmatprep.mubr.f32.mxu0 0.0
    %192 = vmatmul.mubr.f32.gmra.mxu0 %v116
    %v193 = vpop.f32.mrf.mxu0
    %v194 = vadd.f32 0.0, %v193
    %v195 = vpop.f32.mrf.mxu0
    %v196 = vadd.f32 0.0, %v195
    %197 = vmatprep.mubr.f32.mxu0 0.0
    %198 = vmatmul.mubr.f32.gmra.mxu0 %v119
    %v199 = vpop.f32.mrf.mxu0
    %v200 = vadd.f32 0.0, %v199
    %v201 = vpop.f32.mrf.mxu0
    %v202 = vadd.f32 0.0, %v201
    %203 = vmatprep.mubr.f32.mxu0 0.0
    %204 = vmatmul.mubr.f32.gmra.mxu0 %v122
    %v205 = vpop.f32.mrf.mxu0
    %v206 = vadd.f32 0.0, %v205
    %v207 = vpop.f32.mrf.mxu0
    %v208 = vadd.f32 0.0, %v207
    %209 = vmatprep.mubr.f32.mxu0 0.0
    %210 = vmatmul.mubr.f32.gmra.mxu0 %v125
    %v211 = vpop.f32.mrf.mxu0
    %v212 = vadd.f32 0.0, %v211
    %v213 = vpop.f32.mrf.mxu0
    %v214 = vadd.f32 0.0, %v213
    %215 = vdwg.mxu0
    %v217 = vsel %vm114, %v61, 0
    %v220 = vsel %vm114, %v62, 0
    %v223 = vsel %vm114, %v63, 0
    %v226 = vsel %vm114, %v64, 0
    %228 = vmatprep.subr.mxu0 0.0
    %229 = vmatpush1.msra.mxu0 0.0
    %230 = vmatprep.subr.mxu0 0.0
    %231 = vmatpush1.msra.mxu0 0.0
    %232 = vmatprep.subr.mxu0 0.0
    %233 = vmatpush1.msra.mxu0 0.0
    %234 = vmatprep.subr.mxu0 0.0
    %235 = vmatpush1.msra.mxu0 0.0
    %236 = vmatprep.subr.mxu0 0.0
    %237 = vmatpush1.msra.mxu0 0.0
    %238 = vmatprep.subr.mxu0 0.0
    %239 = vmatpush1.msra.mxu0 0.0
    %240 = vmatprep.subr.mxu0 0.0
    %241 = vmatpush1.msra.mxu0 0.0
    %242 = vmatprep.subr.mxu0 %v82
    %243 = vmatpush1.msra.mxu0 %v81
    %244 = vmatprep.subr.mxu0 %v80
    %245 = vmatpush1.msra.mxu0 %v79
    %246 = vmatprep.subr.mxu0 %v78
    %247 = vmatpush1.msra.mxu0 %v77
    %248 = vmatprep.subr.mxu0 %v76
    %249 = vmatpush1.msra.mxu0 %v75
    %250 = vmatprep.subr.mxu0 %v74
    %251 = vmatpush1.msra.mxu0 %v73
    %252 = vmatprep.subr.mxu0 %v72
    %253 = vmatpush1.msra.mxu0 %v71
    %254 = vmatprep.subr.mxu0 %v70
    %255 = vmatpush1.msra.mxu0 %v69
    %256 = vmatprep.subr.mxu0 %v68
    %257 = vmatpush1.msra.mxu0 %v67
    %258 = vmatprep.subr.mxu0 %v66
    %259 = vmatpush1.msra.mxu0 %v65
    %260 = vmatprep.subr.mxu0 0.0
    %261 = vmatpush2.msra.mxu0 0.0
    %262 = vmatprep.subr.mxu0 0.0
    %263 = vmatpush2.msra.mxu0 0.0
    %264 = vmatprep.subr.mxu0 0.0
    %265 = vmatpush2.msra.mxu0 0.0
    %266 = vmatprep.subr.mxu0 0.0
    %267 = vmatpush2.msra.mxu0 0.0
    %268 = vmatprep.subr.mxu0 0.0
    %269 = vmatpush2.msra.mxu0 0.0
    %270 = vmatprep.subr.mxu0 0.0
    %271 = vmatpush2.msra.mxu0 0.0
    %272 = vmatprep.subr.mxu0 0.0
    %273 = vmatpush2.msra.mxu0 0.0
    %274 = vmatprep.subr.mxu0 0.0
    %275 = vmatpush2.msra.mxu0 0.0
    %276 = vmatprep.subr.mxu0 0.0
    %277 = vmatpush2.msra.mxu0 0.0
    %278 = vmatprep.subr.mxu0 0.0
    %279 = vmatpush2.msra.mxu0 0.0
    %280 = vmatprep.subr.mxu0 0.0
    %281 = vmatpush2.msra.mxu0 0.0
    %282 = vmatprep.subr.mxu0 0.0
    %283 = vmatpush2.msra.mxu0 0.0
    %284 = vmatprep.subr.mxu0 0.0
    %285 = vmatpush2.msra.mxu0 0.0
    %286 = vmatprep.subr.mxu0 0.0
    %287 = vmatpush2.msra.mxu0 0.0
    %288 = vmatprep.subr.mxu0 0.0
    %289 = vmatpush2.msra.mxu0 0.0
    %290 = vmatprep.subr.mxu0 0.0
    %291 = vmatpush2.msra.mxu0 0.0
    %292 = vmatprep.mubr.f32.mxu0 0.0
    %293 = vmatmul.mubr.f32.gmra.mxu0 %v217
    %v294 = vpop.f32.mrf.mxu0
    %v295 = vadd.f32 %v194, %v294
    %v296 = vpop.f32.mrf.mxu0
    %v297 = vadd.f32 %v196, %v296
    %298 = vmatprep.mubr.f32.mxu0 0.0
    %299 = vmatmul.mubr.f32.gmra.mxu0 %v220
    %v300 = vpop.f32.mrf.mxu0
    %v301 = vadd.f32 %v200, %v300
    %v302 = vpop.f32.mrf.mxu0
    %v303 = vadd.f32 %v202, %v302
    %304 = vmatprep.mubr.f32.mxu0 0.0
    %305 = vmatmul.mubr.f32.gmra.mxu0 %v223
    %v306 = vpop.f32.mrf.mxu0
    %v307 = vadd.f32 %v206, %v306
    %v308 = vpop.f32.mrf.mxu0
    %v309 = vadd.f32 %v208, %v308
    %310 = vmatprep.mubr.f32.mxu0 0.0
    %311 = vmatmul.mubr.f32.gmra.mxu0 %v226
    %v312 = vpop.f32.mrf.mxu0
    %v313 = vadd.f32 %v212, %v312
    %v314 = vpop.f32.mrf.mxu0
    %v315 = vadd.f32 %v214, %v314
    %316 = vdwg.mxu0
    %v317 = vld [vmem:[%s0 + $0x2] sm:$0xff]
    %v318 = vld [vmem:[%s0 + $0xa] sm:$0xff]
    %v319 = vld [vmem:[%s0 + $0x1a] sm:$0xff]
    %v320 = vld [vmem:[%s0 + $0x22] sm:$0xff]
    %v321 = vmul.f32 %v317, %v48
    %v322 = vmul.f32 %v318, %v48
    %v323 = vmul.f32 %v319, %v48
    %v324 = vmul.f32 %v320, %v48
    %v325 = vadd.f32 %v321, %v59
    %v326 = vadd.f32 %v322, %v59
    %v327 = vadd.f32 %v323, %v59
    %v328 = vadd.f32 %v324, %v59
    %s329 = scalar_lea.vmem [#allocation2], 288
    %v330 = vld [vmem:[%s329] sm:$0xff]
    %v331 = vld [vmem:[%s329 + $0x8] sm:$0xff]
    %v332 = vld [vmem:[%s329 + $0x10] sm:$0xff]
    %v333 = vld [vmem:[%s329 + $0x18] sm:$0xff]
    %v334 = vld [vmem:[%s329 + $0x20] sm:$0xff]
    %v335 = vld [vmem:[%s329 + $0x28] sm:$0xff]
    %v336 = vld [vmem:[%s329 + $0x30] sm:$0xff]
    %v337 = vld [vmem:[%s329 + $0x38] sm:$0xff]
    %v338 = vld [vmem:[%s329 + $0x40] sm:$0xff]
    %v339 = vld [vmem:[%s329 + $0x48] sm:$0xff]
    %v340 = vld [vmem:[%s329 + $0x50] sm:$0xff]
    %v341 = vld [vmem:[%s329 + $0x58] sm:$0xff]
    %v342 = vld [vmem:[%s329 + $0x60] sm:$0xff]
    %v343 = vld [vmem:[%s329 + $0x68] sm:$0xff]
    %v344 = vld [vmem:[%s329 + $0x70] sm:$0xff]
    %v345 = vld [vmem:[%s329 + $0x78] sm:$0xff]
    %v346 = vld [vmem:[%s329 + $0x80] sm:$0xff]
    %v347 = vld [vmem:[%s329 + $0x88] sm:$0xff]
    %v349 = vsel %vm114, %v325, 0
    %v352 = vsel %vm114, %v326, 0
    %v355 = vsel %vm114, %v327, 0
    %v358 = vsel %vm114, %v328, 0
    %360 = vmatprep.subr.mxu0 0.0
    %361 = vmatpush1.msra.mxu0 0.0
    %362 = vmatprep.subr.mxu0 0.0
    %363 = vmatpush1.msra.mxu0 0.0
    %364 = vmatprep.subr.mxu0 0.0
    %365 = vmatpush1.msra.mxu0 0.0
    %366 = vmatprep.subr.mxu0 0.0
    %367 = vmatpush1.msra.mxu0 0.0
    %368 = vmatprep.subr.mxu0 0.0
    %369 = vmatpush1.msra.mxu0 0.0
    %370 = vmatprep.subr.mxu0 0.0
    %371 = vmatpush1.msra.mxu0 0.0
    %372 = vmatprep.subr.mxu0 0.0
    %373 = vmatpush1.msra.mxu0 0.0
    %374 = vmatprep.subr.mxu0 %v347
    %375 = vmatpush1.msra.mxu0 %v346
    %376 = vmatprep.subr.mxu0 %v345
    %377 = vmatpush1.msra.mxu0 %v344
    %378 = vmatprep.subr.mxu0 %v343
    %379 = vmatpush1.msra.mxu0 %v342
    %380 = vmatprep.subr.mxu0 %v341
    %381 = vmatpush1.msra.mxu0 %v340
    %382 = vmatprep.subr.mxu0 %v339
    %383 = vmatpush1.msra.mxu0 %v338
    %384 = vmatprep.subr.mxu0 %v337
    %385 = vmatpush1.msra.mxu0 %v336
    %386 = vmatprep.subr.mxu0 %v335
    %387 = vmatpush1.msra.mxu0 %v334
    %388 = vmatprep.subr.mxu0 %v333
    %389 = vmatpush1.msra.mxu0 %v332
    %390 = vmatprep.subr.mxu0 %v331
    %391 = vmatpush1.msra.mxu0 %v330
    %392 = vmatprep.subr.mxu0 0.0
    %393 = vmatpush2.msra.mxu0 0.0
    %394 = vmatprep.subr.mxu0 0.0
    %395 = vmatpush2.msra.mxu0 0.0
    %396 = vmatprep.subr.mxu0 0.0
    %397 = vmatpush2.msra.mxu0 0.0
    %398 = vmatprep.subr.mxu0 0.0
    %399 = vmatpush2.msra.mxu0 0.0
    %400 = vmatprep.subr.mxu0 0.0
    %401 = vmatpush2.msra.mxu0 0.0
    %402 = vmatprep.subr.mxu0 0.0
    %403 = vmatpush2.msra.mxu0 0.0
    %404 = vmatprep.subr.mxu0 0.0
    %405 = vmatpush2.msra.mxu0 0.0
    %406 = vmatprep.subr.mxu0 0.0
    %407 = vmatpush2.msra.mxu0 0.0
    %408 = vmatprep.subr.mxu0 0.0
    %409 = vmatpush2.msra.mxu0 0.0
    %410 = vmatprep.subr.mxu0 0.0
    %411 = vmatpush2.msra.mxu0 0.0
    %412 = vmatprep.subr.mxu0 0.0
    %413 = vmatpush2.msra.mxu0 0.0
    %414 = vmatprep.subr.mxu0 0.0
    %415 = vmatpush2.msra.mxu0 0.0
    %416 = vmatprep.subr.mxu0 0.0
    %417 = vmatpush2.msra.mxu0 0.0
    %418 = vmatprep.subr.mxu0 0.0
    %419 = vmatpush2.msra.mxu0 0.0
    %420 = vmatprep.subr.mxu0 0.0
    %421 = vmatpush2.msra.mxu0 0.0
    %422 = vmatprep.subr.mxu0 0.0
    %423 = vmatpush2.msra.mxu0 0.0
    %424 = vmatprep.mubr.f32.mxu0 0.0
    %425 = vmatmul.mubr.f32.gmra.mxu0 %v349
    %v426 = vpop.f32.mrf.mxu0
    %v427 = vadd.f32 0.0, %v426
    %v428 = vpop.f32.mrf.mxu0
    %v429 = vadd.f32 0.0, %v428
    %430 = vmatprep.mubr.f32.mxu0 0.0
    %431 = vmatmul.mubr.f32.gmra.mxu0 %v352
    %v432 = vpop.f32.mrf.mxu0
    %v433 = vadd.f32 0.0, %v432
    %v434 = vpop.f32.mrf.mxu0
    %v435 = vadd.f32 0.0, %v434
    %436 = vmatprep.mubr.f32.mxu0 0.0
    %437 = vmatmul.mubr.f32.gmra.mxu0 %v355
    %v438 = vpop.f32.mrf.mxu0
    %v439 = vadd.f32 0.0, %v438
    %v440 = vpop.f32.mrf.mxu0
    %v441 = vadd.f32 0.0, %v440
    %442 = vmatprep.mubr.f32.mxu0 0.0
    %443 = vmatmul.mubr.f32.gmra.mxu0 %v358
    %v444 = vpop.f32.mrf.mxu0
    %v445 = vadd.f32 0.0, %v444
    %v446 = vpop.f32.mrf.mxu0
    %v447 = vadd.f32 0.0, %v446
    %448 = vdwg.mxu0
    %v449 = vadd.f32 %v295, %v427
    %v450 = vadd.f32 %v297, %v429
    %v451 = vadd.f32 %v301, %v433
    %v452 = vadd.f32 %v303, %v435
    %v453 = vadd.f32 %v307, %v439
    %v454 = vadd.f32 %v309, %v441
    %v455 = vadd.f32 %v313, %v445
    %v456 = vadd.f32 %v315, %v447
    %v457 = vld [vmem:[%s4] sm:$0x3]
    %v459 = vlaneseq
    %v460 = vshrl.u32 %v459, 7
    %v461 = vsub.s32 0, %v460
    %v462 = vrot.slane %v457, %v461
    %v463 = vlaneseq
    %v464 = vshrl.u32 %v463, 7
    %v465 = vsub.s32 1, %v464
    %v466 = vrot.slane %v457, %v465
    %v469 = vadd.f32 %v449, %v462
    %v470 = vadd.f32 %v450, %v466
    %v471 = vadd.f32 %v451, %v462
    %v472 = vadd.f32 %v452, %v466
    %v473 = vadd.f32 %v453, %v462
    %v474 = vadd.f32 %v454, %v466
    %v475 = vadd.f32 %v455, %v462
    %v476 = vadd.f32 %v456, %v466
    %v477 = vmax.f32 %v469, 0.0
    %v478 = vmax.f32 %v471, 0.0
    %v479 = vmax.f32 %v473, 0.0
    %v480 = vmax.f32 %v475, 0.0
    %481 = vst [vmem:[#allocation5] sm:$0xff] %v477
    %482 = vst [vmem:[#allocation5 + $0x8] sm:$0xff] %v478
    %483 = vst [vmem:[#allocation5 + $0x10] sm:$0xff] %v479
    %484 = vst [vmem:[#allocation5 + $0x18] sm:$0xff] %v480
    %485 = vst [vmem:[#allocation6] sm:$0xff] %v470
    %486 = vst [vmem:[#allocation6 + $0x8] sm:$0xff] %v472
    %487 = vst [vmem:[#allocation6 + $0x10] sm:$0xff] %v474
    %488 = vst [vmem:[#allocation6 + $0x18] sm:$0xff] %v476
    %v489 = vadd.f32 %v477, %v478
    %v490 = vadd.f32 %v489, %v479
    %v491 = vadd.f32 %v490, %v480
    %v492 = vrot.slane %v491, 4
    %v493 = vadd.f32 %v491, %v492
    %v494 = vrot.slane %v493, 2
    %v495 = vadd.f32 %v493, %v494
    %v496 = vrot.slane %v495, 1
    %v497 = vadd.f32 %v495, %v496
    %498 = vst [vmem:[#allocation8] sm:$0x1] %v497
    %v499 = vmul.f32 %v477, %v477
    %v500 = vmul.f32 %v478, %v478
    %v501 = vmul.f32 %v479, %v479
    %v502 = vmul.f32 %v480, %v480
    %v503 = vadd.f32 %v499, %v500
    %v504 = vadd.f32 %v503, %v501
    %v505 = vadd.f32 %v504, %v502
    %v506 = vrot.slane %v505, 4
    %v507 = vadd.f32 %v505, %v506
    %v508 = vrot.slane %v507, 2
    %v509 = vadd.f32 %v507, %v508
    %v510 = vrot.slane %v509, 1
    %v511 = vadd.f32 %v509, %v510
    %512 = vst [vmem:[#allocation8 + $0x1] sm:$0x1] %v511
    // Predicated region
    $region26: #{tpu_custom_call.1} parent=1 // pred_check
      _
    $region27: #{tpu_custom_call.1} parent=1 // pred_check_branch
      %514 = sbr.rel (0) target = $region29
    $region28: #{tpu_custom_call.1} parent=1 // pred_region
      %s516 = ssub.s32 512, 512
      %517 = vsyncadd [#allocation4], %s516
      %s518 = sshll.u32 [#allocation5], 4
      %s519 = int_to_ptr.vmem [resolvable:$true] %s518
      %524 = dma.vmem_to_hbm [thread:$0]  %s519, 512, %s5, [#allocation4], 128, 128, 8
    $region29: #{tpu_custom_call.1} parent=1 // pred_fallthru
      _
    // Predicated region
    $region30: #{tpu_custom_call.1} parent=1 // pred_check
      _
    $region31: #{tpu_custom_call.1} parent=1 // pred_check_branch
      %526 = sbr.rel (0) target = $region33
    $region32: #{tpu_custom_call.1} parent=1 // pred_region
      %s528 = ssub.s32 512, 512
      %529 = vsyncadd [#allocation7], %s528
      %s530 = sshll.u32 [#allocation6], 4
      %s531 = int_to_ptr.vmem [resolvable:$true] %s530
      %536 = dma.vmem_to_hbm [thread:$0]  %s531, 512, %s6, [#allocation7], 128, 128, 8
    $region33: #{tpu_custom_call.1} parent=1 // pred_fallthru
      _
    // Predicated region
    $region34: #{tpu_custom_call.1} parent=1 // pred_check
      _
    $region35: #{tpu_custom_call.1} parent=1 // pred_check_branch
      %538 = sbr.rel (0) target = $region37
    $region36: #{tpu_custom_call.1} parent=1 // pred_region
      %s540 = ssub.s32 32, 32
      %541 = vsyncadd [#allocation7], %s540
      %s543 = sshll.u32 [#allocation8], 4
      %s544 = int_to_ptr.vmem [resolvable:$true] %s543
      %546 = dma.vmem_to_hbm [thread:$0]  %s544, 32, %s7, [#allocation7]
    $region37: #{tpu_custom_call.1} parent=1 // pred_fallthru
      _
    // Predicated region
    $region38: #{tpu_custom_call.1} parent=1 // pred_check
      _
    $region39: #{tpu_custom_call.1} parent=1 // pred_check_branch
      %548 = sbr.rel (0) target = $region41
    $region40: #{tpu_custom_call.1} parent=1 // pred_region
      %549 = dma.done [#allocation4], 512
    $region41: #{tpu_custom_call.1} parent=1 // pred_fallthru
      _
    // Predicated region
    $region42: #{tpu_custom_call.1} parent=1 // pred_check
      _
    $region43: #{tpu_custom_call.1} parent=1 // pred_check_branch
      %551 = sbr.rel (0) target = $region45
    $region44: #{tpu_custom_call.1} parent=1 // pred_region
      %552 = dma.done [#allocation7], 512
    $region45: #{tpu_custom_call.1} parent=1 // pred_fallthru
      _
    // Predicated region
    $region46: #{tpu_custom_call.1} parent=1 // pred_check
      _
    $region47: #{tpu_custom_call.1} parent=1 // pred_check_branch
      %554 = sbr.rel (0) target = $region49
    $region48: #{tpu_custom_call.1} parent=1 // pred_region
      %555 = dma.done [#allocation7], 32
    $region49: #{tpu_custom_call.1} parent=1 // pred_fallthru
      _
    %556 = vsyncpa [#allocation3], 1
    %557 = vsyncpa [#allocation4], 1
    %558 = vsyncpa [#allocation7], 1

</llo_original>
